<compile_context>
chip_gen: v6e
topology: v6e:2x2x1
jax: 0.10.0
libtpu: 0.0.40
codegen_flags: <defaults>
</compile_context>

<pallas_src>
import jax
import jax.numpy as jnp
from jax.experimental import pallas as pl
from jax.experimental.pallas import tpu as pltpu


# ---------------------------------------------------------------------------
# True identity: the faithful (and fastest) translation of the module.
# ---------------------------------------------------------------------------
def identity_pallas(x: jax.Array) -> jax.Array:
    """Identity forward: a no-op pass-through (no kernel, no HBM traffic)."""
    return x


# ---------------------------------------------------------------------------
# Optional materialized copy, implemented as an optimized Pallas kernel.
# ---------------------------------------------------------------------------
_LANE = 128
_LANE_CANDIDATES = (2048, 1024, 512, 256, 128)   # lane-dense widths (multiples of 128)
_SINGLE_BLOCK_BYTES = 4 * 1024 * 1024            # whole-array-in-one-block fast path
_TILE_BLOCK_BYTES = 2 * 1024 * 1024              # per-block target (v7x-safe: 4x = 8 MiB in flight)


def _copy_kernel(x_ref, o_ref):
    # Straight pass-through of the current tile.
    o_ref[...] = x_ref[...]


def _sublane_multiple(dtype) -> int:
    # (8, 128) for 32-bit, (16, 128) for 16-bit, (32, 128) for 8-bit dtypes.
    itemsize = jnp.dtype(dtype).itemsize
    return max(8, 8 * (4 // max(1, itemsize)))


def _copy_2d(x2: jax.Array, block_rows: int, grid) -> jax.Array:
    rows, cols = x2.shape
    return pl.pallas_call(
        _copy_kernel,
        out_shape=jax.ShapeDtypeStruct((rows, cols), x2.dtype),
        grid_spec=pltpu.PrefetchScalarGridSpec(
            num_scalar_prefetch=0,
            grid=grid,
            in_specs=[pl.BlockSpec((block_rows, cols), lambda i: (i, 0))],
            out_specs=pl.BlockSpec((block_rows, cols), lambda i: (i, 0)),
        ),
        compiler_params=pltpu.CompilerParams(
            dimension_semantics=("parallel",),
            vmem_limit_bytes=32 * 1024 * 1024,
        ),
    )(x2)


def identity_copy_pallas(x: jax.Array) -> jax.Array:
    """Identity that materializes a fresh output via a lane-dense Pallas copy."""
    orig_shape = x.shape
    dtype = x.dtype
    n = int(x.size)
    if n == 0:
        return x

    itemsize = jnp.dtype(dtype).itemsize
    total_bytes = n * itemsize

    # --- choose a lane-dense 2D view: last dim a large multiple of 128 -------
    cols = None
    if n % _LANE == 0:
        for c in _LANE_CANDIDATES:
            if n % c == 0:
                cols = c
                break

    if cols is None:
        # Ragged total size (not a multiple of 128): if small, copy as a single
        # full-extent block (full-extent blocks are exempt from the (8,128)
        # alignment rule); otherwise the pass-through is already exact.
        if total_bytes <= _SINGLE_BLOCK_BYTES:
            x2 = x.reshape(1, n)
            out2 = _copy_2d(x2, 1, (1,))
            return out2.reshape(orig_shape)
        return x  # exact identity; a giant ragged copy kernel adds no value

    rows = n // cols
    x2 = x.reshape(rows, cols)   # metadata-only for contiguous input

    if total_bytes <= _SINGLE_BLOCK_BYTES:
        # Whole array as one full-extent block — no tiling loop at all.
        block_rows, grid = rows, (1,)
    else:
        sub = _sublane_multiple(dtype)
        block_rows = max(sub, (_TILE_BLOCK_BYTES // (cols * itemsize)) // sub * sub)
        block_rows = min(block_rows, rows)
        grid = (pl.cdiv(rows, block_rows),)   # partial last block handled by masking

    out2 = _copy_2d(x2, block_rows, grid)
    return out2.reshape(orig_shape)


if __name__ == "__main__":
    key = jax.random.PRNGKey(0)
    k0, k1 = jax.random.split(key)

    # Small NCDHW input consistent with a UNet3D forward:
    # batch=2, channels=4, depth=8, height=16, width=16.
    x_small = jax.random.normal(k0, (2, 4, 8, 16, 16), dtype=jnp.float32)

    # Larger input to exercise the tiled (multi-block, parallel-grid) path.
    x_big = jax.random.normal(k1, (4, 8, 16, 32, 128), dtype=jnp.float32)

    # True identity (elided) path.
    y0 = jax.block_until_ready(identity_pallas(x_small))
    assert y0.shape == x_small.shape and y0.dtype == x_small.dtype
    assert bool(jnp.array_equal(y0, x_small))

    # Materialized copy kernel: single full-extent block path.
    y1 = jax.block_until_ready(identity_copy_pallas(x_small))
    assert y1.shape == x_small.shape and y1.dtype == x_small.dtype
    assert bool(jnp.array_equal(y1, x_small))

    # Materialized copy kernel: tiled, lane-dense path.
    y2 = jax.block_until_ready(identity_copy_pallas(x_big))
    assert y2.shape == x_big.shape and y2.dtype == x_big.dtype
    assert bool(jnp.array_equal(y2, x_big))

    print("KERNEL_OK")
</pallas_src>

<mosaic_0001>
module attributes {stable_mosaic.version = 11 : i64} {
  func.func @_copy_kernel(%arg0: i32, %arg1: memref<8x2048xf32, #tpu.memory_space<vmem>>, %arg2: memref<8x2048xf32, #tpu.memory_space<vmem>>) attributes {dimension_semantics = [#tpu.dimension_semantics<parallel>], iteration_bounds = array<i64: 1>, scalar_prefetch = 0 : i64, scratch_operands = 0 : i64, tpu.core_type = #tpu.core_type<tc>, window_params = [{transform_indices = @transform_0, window_bounds = array<i64: 8, 2048>}, {transform_indices = @transform_1, window_bounds = array<i64: 8, 2048>}]} {
    %c0 = arith.constant 0 : index
    %c0_0 = arith.constant 0 : index
    %0 = vector.load %arg1[%c0, %c0_0] : memref<8x2048xf32, #tpu.memory_space<vmem>>, vector<8x2048xf32>
    %c0_1 = arith.constant 0 : index
    %c0_2 = arith.constant 0 : index
    %1 = vector.load %arg2[%c0_1, %c0_2] : memref<8x2048xf32, #tpu.memory_space<vmem>>, vector<8x2048xf32>
    tpu.vector_store %arg2[%c0_1, %c0_2], %0 {strides = array<i32>} : memref<8x2048xf32, #tpu.memory_space<vmem>>, vector<8x2048xf32>,
    return
  }
  func.func @transform_0(%arg0: i32) -> (i32, i32) {
    %c0_i32 = arith.constant 0 : i32
    %c0_i32_0 = arith.constant 0 : i32
    return %arg0, %c0_i32 : i32, i32
  }
  func.func @transform_1(%arg0: i32) -> (i32, i32) {
    %c0_i32 = arith.constant 0 : i32
    %c0_i32_0 = arith.constant 0 : i32
    return %arg0, %c0_i32 : i32, i32
  }
}

</mosaic_0001>

<llo_original>
// kernel: tpu_custom_call.1
$region0: #{tpu_custom_call.1}
  #allocation0 [shape = 'u32[]', space=smem, size = 0x4, offset = 0x4, fixed_abs, tag = 'smem constant byte address 0x4 - core index']
  #allocation1 [shape = 'u32[144,128]{1,0:T(1,128)}', space=vmem, size = 0x12000, scoped, tag = 'internal scratch']
  %s0 = inlined_call_operand.hbm [shape: f32[8,2048], index: 0, kind: input, shape index: {}]
  %s1 = inlined_call_operand.hbm [shape: f32[8,2048], index: 1, kind: output, shape index: {}]
  %s2 = sld [smem:[#allocation0]]
  $region18: #{tpu_custom_call.1} parent=0
    _
  %s4 = ssub.s32 1, %s2
  %s5 = scalar_select 0, %s4, %s2
  $region1: #{tpu_custom_call.1} parent=0
    #allocation2 [shape = 'u8[65536]{0}', space=vmem, size = 0x10000, scoped, tag = 'input window, operand 0, single buffered']
    #allocation3 [shape = 's32[1]{0}', space=sflag, size = 0x4, scoped, tag = 'scoped memory for tpu_custom_call.1']
    #allocation4 [shape = 's32[1]{0}', space=sflag, size = 0x4, scoped, tag = 'scoped memory for tpu_custom_call.1']
    #allocation5 [shape = 'u8[65536]{0}', space=vmem, size = 0x10000, scoped, tag = 'output window, operand 0, single buffered']
    %6 = vsyncpa [#allocation3], 0
    %7 = vsyncpa [#allocation4], 0
    // Predicated region
    $region2: #{tpu_custom_call.1} parent=1 // pred_check
      _
    $region3: #{tpu_custom_call.1} parent=1 // pred_check_branch
      %9 = sbr.rel (0) target = $region5
    $region4: #{tpu_custom_call.1} parent=1 // pred_region
      %s11 = ssub.s32 2048, 2048
      %12 = vsyncadd [#allocation3], %s11
      %s14 = sshll.u32 [#allocation2], 4
      %s15 = int_to_ptr.vmem [resolvable:$true] %s14
      %17 = dma.hbm_to_vmem [thread:$0]  %s0, 2048, %s15, [#allocation3]
    $region5: #{tpu_custom_call.1} parent=1 // pred_fallthru
      _
    // Predicated region
    $region6: #{tpu_custom_call.1} parent=1 // pred_check
      _
    $region7: #{tpu_custom_call.1} parent=1 // pred_check_branch
      %19 = sbr.rel (0) target = $region9
    $region8: #{tpu_custom_call.1} parent=1 // pred_region
      %20 = dma.done [#allocation3], 2048
    $region9: #{tpu_custom_call.1} parent=1 // pred_fallthru
      _
    %v21 = vld [vmem:[#allocation2] sm:$0xff]
    %v22 = vld [vmem:[#allocation2 + $0x8] sm:$0xff]
    %v23 = vld [vmem:[#allocation2 + $0x10] sm:$0xff]
    %v24 = vld [vmem:[#allocation2 + $0x18] sm:$0xff]
    %v25 = vld [vmem:[#allocation2 + $0x20] sm:$0xff]
    %v26 = vld [vmem:[#allocation2 + $0x28] sm:$0xff]
    %v27 = vld [vmem:[#allocation2 + $0x30] sm:$0xff]
    %v28 = vld [vmem:[#allocation2 + $0x38] sm:$0xff]
    %v29 = vld [vmem:[#allocation2 + $0x40] sm:$0xff]
    %v30 = vld [vmem:[#allocation2 + $0x48] sm:$0xff]
    %v31 = vld [vmem:[#allocation2 + $0x50] sm:$0xff]
    %v32 = vld [vmem:[#allocation2 + $0x58] sm:$0xff]
    %v33 = vld [vmem:[#allocation2 + $0x60] sm:$0xff]
    %v34 = vld [vmem:[#allocation2 + $0x68] sm:$0xff]
    %v35 = vld [vmem:[#allocation2 + $0x70] sm:$0xff]
    %v36 = vld [vmem:[#allocation2 + $0x78] sm:$0xff]
    %37 = vst [vmem:[#allocation5] sm:$0xff] %v21
    %38 = vst [vmem:[#allocation5 + $0x8] sm:$0xff] %v22
    %39 = vst [vmem:[#allocation5 + $0x10] sm:$0xff] %v23
    %40 = vst [vmem:[#allocation5 + $0x18] sm:$0xff] %v24
    %41 = vst [vmem:[#allocation5 + $0x20] sm:$0xff] %v25
    %42 = vst [vmem:[#allocation5 + $0x28] sm:$0xff] %v26
    %43 = vst [vmem:[#allocation5 + $0x30] sm:$0xff] %v27
    %44 = vst [vmem:[#allocation5 + $0x38] sm:$0xff] %v28
    %45 = vst [vmem:[#allocation5 + $0x40] sm:$0xff] %v29
    %46 = vst [vmem:[#allocation5 + $0x48] sm:$0xff] %v30
    %47 = vst [vmem:[#allocation5 + $0x50] sm:$0xff] %v31
    %48 = vst [vmem:[#allocation5 + $0x58] sm:$0xff] %v32
    %49 = vst [vmem:[#allocation5 + $0x60] sm:$0xff] %v33
    %50 = vst [vmem:[#allocation5 + $0x68] sm:$0xff] %v34
    %51 = vst [vmem:[#allocation5 + $0x70] sm:$0xff] %v35
    %52 = vst [vmem:[#allocation5 + $0x78] sm:$0xff] %v36
    // Predicated region
    $region10: #{tpu_custom_call.1} parent=1 // pred_check
      _
    $region11: #{tpu_custom_call.1} parent=1 // pred_check_branch
      %54 = sbr.rel (0) target = $region13
    $region12: #{tpu_custom_call.1} parent=1 // pred_region
      %s56 = ssub.s32 2048, 2048
      %57 = vsyncadd [#allocation4], %s56
      %s59 = sshll.u32 [#allocation5], 4
      %s60 = int_to_ptr.vmem [resolvable:$true] %s59
      %62 = dma.vmem_to_hbm [thread:$0]  %s60, 2048, %s1, [#allocation4]
    $region13: #{tpu_custom_call.1} parent=1 // pred_fallthru
      _
    // Predicated region
    $region14: #{tpu_custom_call.1} parent=1 // pred_check
      _
    $region15: #{tpu_custom_call.1} parent=1 // pred_check_branch
      %64 = sbr.rel (0) target = $region17
    $region16: #{tpu_custom_call.1} parent=1 // pred_region
      %65 = dma.done [#allocation4], 2048
    $region17: #{tpu_custom_call.1} parent=1 // pred_fallthru
      _
    %66 = vsyncpa [#allocation3], 1
    %67 = vsyncpa [#allocation4], 1

</llo_original>
